<compile_context>
chip_gen: v7x
topology: tpu7x:2x2x1
jax: 0.10.0
libtpu: 0.0.40
codegen_flags: <defaults>
</compile_context>

<pallas_src>
import math

import jax
import jax.numpy as jnp
from jax.experimental import pallas as pl
from jax.experimental.pallas import tpu as pltpu


_SQRT_2_OVER_PI = math.sqrt(2.0 / math.pi)


def _gelu_tanh(x):
    # torch.nn.GELU(approximate='tanh'):
    #   0.5 * x * (1 + tanh(sqrt(2/pi) * (x + 0.044715 x^3)))
    # == x * sigmoid(2 * sqrt(2/pi) * (x + 0.044715 x^3))   (one fewer mul/add;
    # exp goes to the EUP slot, same as tanh).
    z = (2.0 * _SQRT_2_OVER_PI) * (x + 0.044715 * (x * x * x))
    return x / (1.0 + jnp.exp(-z))


# --------------------------------------------------------------------------
# Kernels
# --------------------------------------------------------------------------

def _resident_kernel(x_ref, wfc_ref, bfc_ref, wproj_ref, bproj_ref, o_ref):
    """Full weights live in VMEM; one grid step per row tile."""
    h = jnp.dot(x_ref[...], wfc_ref[...], preferred_element_type=jnp.float32)
    h = _gelu_tanh(h + bfc_ref[...])                       # f32 bias + GELU
    # NOTE: for bf16 weights, h is downcast to bf16 before the second matmul
    # (MXU peak / half the bytes) — intentional precision tradeoff.
    y = jnp.dot(h.astype(wproj_ref.dtype), wproj_ref[...],
                preferred_element_type=jnp.float32)
    o_ref[...] = (y + bproj_ref[...]).astype(o_ref.dtype)


def _streamed_kernel(x_ref, wfc_ref, bfc_ref, wproj_ref, bproj_ref, o_ref,
                     *acc_scratch):
    """Hidden dim streamed in chunks (reduction axis k, last grid axis)."""
    # f32 outputs accumulate directly into the (k-resident) output tile;
    # other output dtypes use a dedicated f32 scratch accumulator.
    acc_ref = acc_scratch[0] if acc_scratch else o_ref
    k = pl.program_id(1)

    h = jnp.dot(x_ref[...], wfc_ref[...], preferred_element_type=jnp.float32)
    h = _gelu_tanh(h + bfc_ref[...])
    part = jnp.dot(h.astype(wproj_ref.dtype), wproj_ref[...],
                   preferred_element_type=jnp.float32)

    @pl.when(k == 0)
    def _():
        acc_ref[...] = part.astype(acc_ref.dtype)          # no zero-fill + add

    @pl.when(k > 0)
    def _():
        acc_ref[...] += part.astype(acc_ref.dtype)

    @pl.when(k == pl.num_programs(1) - 1)
    def _():
        o_ref[...] = (acc_ref[...].astype(jnp.float32)
                      + bproj_ref[...]).astype(o_ref.dtype)


# --------------------------------------------------------------------------
# Tile planning (generation-aware VMEM budget)
# --------------------------------------------------------------------------

def _vmem_capacity_bytes():
    try:
        return int(pltpu.get_tpu_info().vmem_capacity_bytes)
    except Exception:
        return 64 << 20  # conservative default = v7x per-TensorCore VMEM


def _sublane_align(dtype):
    # 8 sublanes of 32-bit; sub-32-bit dtypes pack along sublanes.
    return 8 * max(1, 4 // jnp.dtype(dtype).itemsize)


def _largest_divisor(total, target, align):
    """Largest multiple of `align` that divides `total` and is <= target, or None."""
    t = (min(target, total) // align) * align
    while t >= align:
        if total % t == 0:
            return t
        t -= align
    return None


def _pick_row_tile(M, target, base_align):
    # Prefer MXU-sized row tiles (256 for v6e/v7x, 128 for v5e), then the
    # dtype's sublane packing; fall back to the full extent for awkward M.
    for a in (256, 128, base_align):
        t = _largest_divisor(M, target, a)
        if t is not None:
            return t
    return M


def _plan_tiles(M, n_embd, hidden, x_dtype, w_dtype, o_dtype):
    xi = jnp.dtype(x_dtype).itemsize
    wi = jnp.dtype(w_dtype).itemsize
    oi = jnp.dtype(o_dtype).itemsize
    align = _sublane_align(x_dtype)
    cap = int(0.75 * _vmem_capacity_bytes())     # headroom below physical VMEM
    bias_bytes = 2 * (hidden + n_embd) * 4

    # ---- resident path: both weights kept in VMEM, DMA'd exactly once -----
    # (counted double-buffered to be conservative about what Mosaic allocates)
    w_resident = 2 * (n_embd * hidden + hidden * n_embd) * wi
    if w_resident + bias_bytes <= cap // 2:
        remaining = cap - w_resident - bias_bytes
        # per-row cost: x tile (2 buf) + out tile (2 buf) + f32 hidden interm.
        per_row = 2 * n_embd * xi + 2 * n_embd * oi + 2 * hidden * 4
        tm_budget = remaining // per_row
        if tm_budget >= min(align, M):
            tm = _pick_row_tile(M, min(1024, int(tm_budget)), align)
            if tm * per_row <= remaining:
                return dict(mode="resident", tm=tm, tk=hidden, vmem_limit=cap)

    # ---- streamed path: weights in hidden-dim chunks, f32 accumulator -----
    # TODO(synk): for very large n_embd (>= ~8K) on v7x an additional output-
    # column grid axis (tn) would be needed to keep the resident tiles small.
    per_row_fixed = 2 * n_embd * xi + 2 * n_embd * oi
    if jnp.dtype(o_dtype) != jnp.dtype(jnp.float32):
        per_row_fixed += n_embd * 4                         # f32 acc scratch
    tm = _pick_row_tile(M, 512, align)
    while tm > align and tm * per_row_fixed > cap // 2:
        t = _largest_divisor(M, tm - align, align)
        if t is None:
            break
        tm = t
    remaining = cap - tm * per_row_fixed - bias_bytes
    per_col = 4 * n_embd * wi + 2 * tm * 4      # wfc+wproj chunks (2buf) + f32 h chunk
    tk_budget = max(128, remaining // max(per_col, 1))
    tk = _largest_divisor(hidden, min(2048, int(tk_budget)), 128) or hidden
    return dict(mode="streamed", tm=tm, tk=tk, vmem_limit=cap)


# --------------------------------------------------------------------------
# Wrappers
# --------------------------------------------------------------------------

def mlp_pallas(x2d, w_fc, b_fc, w_proj, b_proj, *, tm=None, tk=None):
    """x2d: (M, n_embd). w_fc: (n_embd, 4n). w_proj: (4n, n_embd)."""
    M, n_embd = x2d.shape
    hidden = w_fc.shape[1]
    assert w_fc.shape == (n_embd, hidden) and w_proj.shape == (hidden, n_embd)
    out_dtype = x2d.dtype

    plan = _plan_tiles(M, n_embd, hidden, x2d.dtype, w_fc.dtype, out_dtype)
    if tm is not None:
        plan["tm"] = tm
    if tk is not None:
        plan["tk"] = tk
        plan["mode"] = "resident" if tk == hidden else "streamed"
    tm, tk = plan["tm"], plan["tk"]
    assert M % tm == 0 and hidden % tk == 0

    b_fc2 = b_fc.reshape(1, hidden).astype(jnp.float32)
    b_proj2 = b_proj.reshape(1, n_embd).astype(jnp.float32)

    cost = pl.CostEstimate(
        flops=4 * M * n_embd * hidden,
        transcendentals=M * hidden,
        bytes_accessed=(M * n_embd * jnp.dtype(x2d.dtype).itemsize
                        + 2 * n_embd * hidden * jnp.dtype(w_fc.dtype).itemsize
                        + (hidden + n_embd) * 4
                        + M * n_embd * jnp.dtype(out_dtype).itemsize))

    if plan["mode"] == "resident":
        # Weights DMA'd once (constant block index over the whole grid).
        return pl.pallas_call(
            _resident_kernel,
            out_shape=jax.ShapeDtypeStruct((M, n_embd), out_dtype),
            grid_spec=pltpu.PrefetchScalarGridSpec(
                num_scalar_prefetch=0,
                grid=(M // tm,),
                in_specs=[
                    pl.BlockSpec((tm, n_embd), lambda i: (i, 0)),      # x tile
                    pl.BlockSpec((n_embd, hidden), lambda i: (0, 0)),  # w_fc
                    pl.BlockSpec((1, hidden), lambda i: (0, 0)),       # b_fc
                    pl.BlockSpec((hidden, n_embd), lambda i: (0, 0)),  # w_proj
                    pl.BlockSpec((1, n_embd), lambda i: (0, 0)),       # b_proj
                ],
                out_specs=pl.BlockSpec((tm, n_embd), lambda i: (i, 0)),
            ),
            compiler_params=pltpu.CompilerParams(
                dimension_semantics=("parallel",),
                vmem_limit_bytes=plan["vmem_limit"]),
            cost_estimate=cost,
        )(x2d, w_fc, b_fc2, w_proj, b_proj2)

    # Streamed path: grid = (row tiles, hidden chunks); reduction axis last.
    use_scratch = jnp.dtype(out_dtype) != jnp.dtype(jnp.float32)
    scratch = [pltpu.VMEM((tm, n_embd), jnp.float32)] if use_scratch else []
    return pl.pallas_call(
        _streamed_kernel,
        out_shape=jax.ShapeDtypeStruct((M, n_embd), out_dtype),
        grid_spec=pltpu.PrefetchScalarGridSpec(
            num_scalar_prefetch=0,
            grid=(M // tm, hidden // tk),
            in_specs=[
                pl.BlockSpec((tm, n_embd), lambda i, k: (i, 0)),   # x tile
                pl.BlockSpec((n_embd, tk), lambda i, k: (0, k)),   # w_fc chunk
                pl.BlockSpec((1, tk), lambda i, k: (0, k)),        # b_fc chunk
                pl.BlockSpec((tk, n_embd), lambda i, k: (k, 0)),   # w_proj chunk
                pl.BlockSpec((1, n_embd), lambda i, k: (0, 0)),    # b_proj
            ],
            out_specs=pl.BlockSpec((tm, n_embd), lambda i, k: (i, 0)),
            scratch_shapes=scratch,
        ),
        compiler_params=pltpu.CompilerParams(
            dimension_semantics=("parallel", "arbitrary"),
            vmem_limit_bytes=plan["vmem_limit"]),
        cost_estimate=cost,
    )(x2d, w_fc, b_fc2, w_proj, b_proj2)


def mlp_forward(x, w_fc, b_fc, w_proj, b_proj, **kw):
    """x: (B, T, n_embd) -> (B, T, n_embd)."""
    B, T, C = x.shape
    y2d = mlp_pallas(x.reshape(B * T, C), w_fc, b_fc, w_proj, b_proj, **kw)
    return y2d.reshape(B, T, C)


def mlp_reference(x, w_fc, b_fc, w_proj, b_proj):
    c = _SQRT_2_OVER_PI
    h = jnp.dot(x.astype(jnp.float32), w_fc.astype(jnp.float32)) + b_fc
    h = 0.5 * h * (1.0 + jnp.tanh(c * (h + 0.044715 * h * h * h)))
    return jnp.dot(h, w_proj.astype(jnp.float32)) + b_proj


# --------------------------------------------------------------------------
# Self-test
# --------------------------------------------------------------------------

if __name__ == "__main__":
    key = jax.random.PRNGKey(0)
    keys = jax.random.split(key, 10)

    # ---- config 1: resident-weights path (B=2, T=8, n_embd=32) -----------
    B, T, n_embd = 2, 8, 32
    hidden = 4 * n_embd
    x = jax.random.normal(keys[0], (B, T, n_embd), dtype=jnp.float32)
    w_fc = jax.random.normal(keys[1], (n_embd, hidden), dtype=jnp.float32) * 0.02
    b_fc = jax.random.normal(keys[2], (hidden,), dtype=jnp.float32) * 0.02
    w_proj = jax.random.normal(keys[3], (hidden, n_embd), dtype=jnp.float32) * 0.02
    b_proj = jax.random.normal(keys[4], (n_embd,), dtype=jnp.float32) * 0.02

    y_ref = mlp_reference(x, w_fc, b_fc, w_proj, b_proj)

    y = jax.block_until_ready(mlp_forward(x, w_fc, b_fc, w_proj, b_proj))
    assert y.shape == (B, T, n_embd)
    assert jnp.allclose(y, y_ref, atol=1e-4, rtol=1e-4)

    y_bf16 = jax.block_until_ready(
        mlp_forward(x.astype(jnp.bfloat16), w_fc.astype(jnp.bfloat16), b_fc,
                    w_proj.astype(jnp.bfloat16), b_proj))
    assert y_bf16.shape == (B, T, n_embd)
    assert jnp.allclose(y_bf16.astype(jnp.float32), y_ref, atol=5e-2, rtol=5e-2)

    # ---- config 2: streamed path forced (2 hidden chunks, tk=128) --------
    B2, T2, n_embd2 = 2, 16, 64
    hidden2 = 4 * n_embd2
    x2 = jax.random.normal(keys[5], (B2, T2, n_embd2), dtype=jnp.float32)
    w_fc2 = jax.random.normal(keys[6], (n_embd2, hidden2), dtype=jnp.float32) * 0.02
    b_fc2 = jax.random.normal(keys[7], (hidden2,), dtype=jnp.float32) * 0.02
    w_proj2 = jax.random.normal(keys[8], (hidden2, n_embd2), dtype=jnp.float32) * 0.02
    b_proj2 = jax.random.normal(keys[9], (n_embd2,), dtype=jnp.float32) * 0.02

    y_ref2 = mlp_reference(x2, w_fc2, b_fc2, w_proj2, b_proj2)

    # f32 output -> in-place accumulation into the output tile (no scratch).
    y2 = jax.block_until_ready(
        mlp_forward(x2, w_fc2, b_fc2, w_proj2, b_proj2, tk=128))
    assert jnp.allclose(y2, y_ref2, atol=1e-4, rtol=1e-4)

    # bf16 output -> f32 VMEM scratch accumulator path.
    y2_bf16 = jax.block_until_ready(
        mlp_forward(x2.astype(jnp.bfloat16), w_fc2.astype(jnp.bfloat16), b_fc2,
                    w_proj2.astype(jnp.bfloat16), b_proj2, tk=128))
    assert jnp.allclose(y2_bf16.astype(jnp.float32), y_ref2, atol=5e-2, rtol=5e-2)

    print("KERNEL_OK")
</pallas_src>

<mosaic_0001>
module attributes {stable_mosaic.version = 11 : i64} {
  func.func @_resident_kernel(%arg0: i32, %arg1: memref<16x32xf32, #tpu.memory_space<vmem>>, %arg2: memref<32x128xf32, #tpu.memory_space<vmem>>, %arg3: memref<1x128xf32, #tpu.memory_space<vmem>>, %arg4: memref<128x32xf32, #tpu.memory_space<vmem>>, %arg5: memref<1x32xf32, #tpu.memory_space<vmem>>, %arg6: memref<16x32xf32, #tpu.memory_space<vmem>>) attributes {dimension_semantics = [#tpu.dimension_semantics<parallel>], iteration_bounds = array<i64: 1>, scalar_prefetch = 0 : i64, scratch_operands = 0 : i64, tpu.core_type = #tpu.core_type<tc>, window_params = [{transform_indices = @transform_0, window_bounds = array<i64: 16, 32>}, {pipeline_mode = #tpu.pipeline_mode<synchronous>, transform_indices = @transform_1, window_bounds = array<i64: 32, 128>}, {pipeline_mode = #tpu.pipeline_mode<synchronous>, transform_indices = @transform_2, window_bounds = array<i64: 1, 128>}, {pipeline_mode = #tpu.pipeline_mode<synchronous>, transform_indices = @transform_3, window_bounds = array<i64: 128, 32>}, {pipeline_mode = #tpu.pipeline_mode<synchronous>, transform_indices = @transform_4, window_bounds = array<i64: 1, 32>}, {transform_indices = @transform_5, window_bounds = array<i64: 16, 32>}]} {
    %c0 = arith.constant 0 : index
    %c0_0 = arith.constant 0 : index
    %0 = vector.load %arg1[%c0, %c0_0] : memref<16x32xf32, #tpu.memory_space<vmem>>, vector<16x32xf32>
    %c0_1 = arith.constant 0 : index
    %c0_2 = arith.constant 0 : index
    %1 = vector.load %arg2[%c0_1, %c0_2] : memref<32x128xf32, #tpu.memory_space<vmem>>, vector<32x128xf32>
    %cst = arith.constant dense<0.000000e+00> : vector<16x128xf32>
    %2 = tpu.matmul %0, %1, %cst {dimension_numbers = #tpu.dot_dimension_numbers<[1], [0], [0], [1], [0, 0, 1, 1], [], []>} : vector<16x32xf32>, vector<32x128xf32>, vector<16x128xf32> -> vector<16x128xf32>
    %c0_3 = arith.constant 0 : index
    %c0_4 = arith.constant 0 : index
    %3 = vector.load %arg3[%c0_3, %c0_4] : memref<1x128xf32, #tpu.memory_space<vmem>>, vector<1x128xf32>
    %4 = vector.broadcast %3 : vector<1x128xf32> to vector<16x128xf32>
    %5 = arith.addf %2, %4 : vector<16x128xf32>
    %6 = arith.mulf %5, %5 : vector<16x128xf32>
    %7 = arith.mulf %6, %5 : vector<16x128xf32>
    %cst_5 = arith.constant 4.471500e-02 : f32
    %8 = vector.broadcast %cst_5 : f32 to vector<16x128xf32>
    %9 = arith.mulf %8, %7 : vector<16x128xf32>
    %10 = arith.addf %5, %9 : vector<16x128xf32>
    %cst_6 = arith.constant 1.59576917 : f32
    %11 = vector.broadcast %cst_6 : f32 to vector<16x128xf32>
    %12 = arith.mulf %11, %10 : vector<16x128xf32>
    %cst_7 = arith.constant 0.000000e+00 : f32
    %13 = vector.broadcast %cst_7 : f32 to vector<16x128xf32>
    %14 = arith.subf %13, %12 : vector<16x128xf32>
    %15 = math.exp %14 : vector<16x128xf32>
    %cst_8 = arith.constant 1.000000e+00 : f32
    %16 = vector.broadcast %cst_8 : f32 to vector<16x128xf32>
    %17 = arith.addf %16, %15 : vector<16x128xf32>
    %18 = arith.divf %5, %17 : vector<16x128xf32>
    %c0_9 = arith.constant 0 : index
    %c0_10 = arith.constant 0 : index
    %19 = vector.load %arg4[%c0_9, %c0_10] : memref<128x32xf32, #tpu.memory_space<vmem>>, vector<128x32xf32>
    %cst_11 = arith.constant dense<0.000000e+00> : vector<16x32xf32>
    %20 = tpu.matmul %18, %19, %cst_11 {dimension_numbers = #tpu.dot_dimension_numbers<[1], [0], [0], [1], [0, 0, 1, 1], [], []>} : vector<16x128xf32>, vector<128x32xf32>, vector<16x32xf32> -> vector<16x32xf32>
    %c0_12 = arith.constant 0 : index
    %c0_13 = arith.constant 0 : index
    %21 = vector.load %arg5[%c0_12, %c0_13] : memref<1x32xf32, #tpu.memory_space<vmem>>, vector<1x32xf32>
    %22 = vector.broadcast %21 : vector<1x32xf32> to vector<16x32xf32>
    %23 = arith.addf %20, %22 : vector<16x32xf32>
    %c0_14 = arith.constant 0 : index
    %c0_15 = arith.constant 0 : index
    %24 = vector.load %arg6[%c0_14, %c0_15] : memref<16x32xf32, #tpu.memory_space<vmem>>, vector<16x32xf32>
    tpu.vector_store %arg6[%c0_14, %c0_15], %23 {strides = array<i32>} : memref<16x32xf32, #tpu.memory_space<vmem>>, vector<16x32xf32>,
    return
  }
  func.func @transform_0(%arg0: i32) -> (i32, i32) {
    %c0_i32 = arith.constant 0 : i32
    %c0_i32_0 = arith.constant 0 : i32
    return %arg0, %c0_i32 : i32, i32
  }
  func.func @transform_1(%arg0: i32) -> (i32, i32) {
    %c0_i32 = arith.constant 0 : i32
    %c0_i32_0 = arith.constant 0 : i32
    %c0_i32_1 = arith.constant 0 : i32
    return %c0_i32, %c0_i32_0 : i32, i32
  }
  func.func @transform_2(%arg0: i32) -> (i32, i32) {
    %c0_i32 = arith.constant 0 : i32
    %c0_i32_0 = arith.constant 0 : i32
    %c0_i32_1 = arith.constant 0 : i32
    return %c0_i32, %c0_i32_0 : i32, i32
  }
  func.func @transform_3(%arg0: i32) -> (i32, i32) {
    %c0_i32 = arith.constant 0 : i32
    %c0_i32_0 = arith.constant 0 : i32
    %c0_i32_1 = arith.constant 0 : i32
    return %c0_i32, %c0_i32_0 : i32, i32
  }
  func.func @transform_4(%arg0: i32) -> (i32, i32) {
    %c0_i32 = arith.constant 0 : i32
    %c0_i32_0 = arith.constant 0 : i32
    %c0_i32_1 = arith.constant 0 : i32
    return %c0_i32, %c0_i32_0 : i32, i32
  }
  func.func @transform_5(%arg0: i32) -> (i32, i32) {
    %c0_i32 = arith.constant 0 : i32
    %c0_i32_0 = arith.constant 0 : i32
    return %arg0, %c0_i32 : i32, i32
  }
}

</mosaic_0001>

<llo_original>
// kernel: tpu_custom_call.1
$region0: #{tpu_custom_call.1}
  #allocation0 [shape = 'u32[]', space=smem, size = 0x4, offset = 0x4, fixed_abs, tag = 'smem constant byte address 0x4 - core index']
  #allocation1 [shape = 'u32[144,128]{1,0:T(1,128)}', space=vmem, size = 0x12000, scoped, tag = 'internal scratch']
  %s0 = inlined_call_operand.vmem [shape: f32[16,32], index: 0, kind: input, shape index: {}]
  %s1 = inlined_call_operand.vmem [shape: f32[32,128], index: 1, kind: input, shape index: {}]
  %s2 = inlined_call_operand.vmem [shape: f32[1,128], index: 2, kind: input, shape index: {}]
  %s3 = inlined_call_operand.vmem [shape: f32[128,32], index: 3, kind: input, shape index: {}]
  %s4 = inlined_call_operand.vmem [shape: f32[1,32], index: 4, kind: input, shape index: {}]
  %s5 = inlined_call_operand.hbm [shape: f32[16,32], index: 5, kind: output, shape index: {}]
  %s6 = sld [smem:[#allocation0]]
  $region30: #{tpu_custom_call.1} parent=0
    _
  %s8 = ssub.s32 1, %s6
  %s9 = scalar_select 0, %s8, %s6
  $region1: #{tpu_custom_call.1} parent=0
    #allocation2 [shape = 'u8[8192]{0}', space=vmem, size = 0x2000, scoped, tag = 'output window, operand 0, single buffered']
    #allocation3 [shape = 's32[1]{0}', space=sflag, size = 0x4, scoped, tag = 'scoped memory for tpu_custom_call.1']
    %10 = vsyncpa [#allocation3], 0
    // Predicated region
    $region2: #{tpu_custom_call.1} parent=1 // pred_check
      _
    $region3: #{tpu_custom_call.1} parent=1 // pred_check_branch
      %12 = sbr.rel (0) target = $region5
    $region4: #{tpu_custom_call.1} parent=1 // pred_region
      _
    $region5: #{tpu_custom_call.1} parent=1 // pred_fallthru
      _
    // Predicated region
    $region6: #{tpu_custom_call.1} parent=1 // pred_check
      _
    $region7: #{tpu_custom_call.1} parent=1 // pred_check_branch
      %14 = sbr.rel (0) target = $region9
    $region8: #{tpu_custom_call.1} parent=1 // pred_region
      _
    $region9: #{tpu_custom_call.1} parent=1 // pred_fallthru
      _
    // Predicated region
    $region10: #{tpu_custom_call.1} parent=1 // pred_check
      _
    $region11: #{tpu_custom_call.1} parent=1 // pred_check_branch
      %16 = sbr.rel (0) target = $region13
    $region12: #{tpu_custom_call.1} parent=1 // pred_region
      _
    $region13: #{tpu_custom_call.1} parent=1 // pred_fallthru
      _
    // Predicated region
    $region14: #{tpu_custom_call.1} parent=1 // pred_check
      _
    $region15: #{tpu_custom_call.1} parent=1 // pred_check_branch
      %18 = sbr.rel (0) target = $region17
    $region16: #{tpu_custom_call.1} parent=1 // pred_region
      _
    $region17: #{tpu_custom_call.1} parent=1 // pred_fallthru
      _
    // Predicated region
    $region18: #{tpu_custom_call.1} parent=1 // pred_check
      _
    $region19: #{tpu_custom_call.1} parent=1 // pred_check_branch
      %20 = sbr.rel (0) target = $region21
    $region20: #{tpu_custom_call.1} parent=1 // pred_region
      _
    $region21: #{tpu_custom_call.1} parent=1 // pred_fallthru
      _
    %v21 = vld [vmem:[%s0] sm:$0xff]
    %v22 = vld [vmem:[%s0 + $0x8] sm:$0xff]
    %v23 = vld [vmem:[%s1] sm:$0xff]
    %v24 = vld [vmem:[%s1 + $0x8] sm:$0xff]
    %v25 = vld [vmem:[%s1 + $0x10] sm:$0xff]
    %v26 = vld [vmem:[%s1 + $0x18] sm:$0xff]
    %v27 = vld [vmem:[%s2] sm:$0x1]
    %v29 = vlaneseq
    %v30 = vshrl.u32 %v29, 7
    %v31 = vsub.s32 0, %v30
    %v32 = vrot.slane %v27, %v31
    %vm34 = vcmask 261120
    %v36 = vsel %vm34, %v21, 0
    %v39 = vsel %vm34, %v22, 0
    %41 = vmatprep.subr.mxu0 0.0
    %42 = vmatpush1.msra.mxu0 %v23
    %43 = vmatprep.subr.mxu0 0.0
    %44 = vmatpush1.msra.mxu0 %v24
    %45 = vmatprep.subr.mxu0 0.0
    %46 = vmatpush1.msra.mxu0 %v25
    %47 = vmatprep.subr.mxu0 0.0
    %48 = vmatpush1.msra.mxu0 %v26
    %49 = vmatprep.subr.mxu0 0.0
    %50 = vmatpush1.msra.mxu0 0.0
    %51 = vmatprep.subr.mxu0 0.0
    %52 = vmatpush1.msra.mxu0 0.0
    %53 = vmatprep.subr.mxu0 0.0
    %54 = vmatpush1.msra.mxu0 0.0
    %55 = vmatprep.subr.mxu0 0.0
    %56 = vmatpush1.msra.mxu0 0.0
    %57 = vmatprep.subr.mxu0 0.0
    %58 = vmatpush1.msra.mxu0 0.0
    %59 = vmatprep.subr.mxu0 0.0
    %60 = vmatpush1.msra.mxu0 0.0
    %61 = vmatprep.subr.mxu0 0.0
    %62 = vmatpush1.msra.mxu0 0.0
    %63 = vmatprep.subr.mxu0 0.0
    %64 = vmatpush1.msra.mxu0 0.0
    %65 = vmatprep.subr.mxu0 0.0
    %66 = vmatpush1.msra.mxu0 0.0
    %67 = vmatprep.subr.mxu0 0.0
    %68 = vmatpush1.msra.mxu0 0.0
    %69 = vmatprep.subr.mxu0 0.0
    %70 = vmatpush1.msra.mxu0 0.0
    %71 = vmatprep.subr.mxu0 0.0
    %72 = vmatpush1.msra.mxu0 0.0
    %73 = vmatprep.subr.mxu0 0.0
    %74 = vmatpush1.msra.mxu0 0.0
    %75 = vmatprep.subr.mxu0 0.0
    %76 = vmatpush1.msra.mxu0 0.0
    %77 = vmatprep.subr.mxu0 0.0
    %78 = vmatpush1.msra.mxu0 0.0
    %79 = vmatprep.subr.mxu0 0.0
    %80 = vmatpush1.msra.mxu0 0.0
    %81 = vmatprep.subr.mxu0 0.0
    %82 = vmatpush1.msra.mxu0 0.0
    %83 = vmatprep.subr.mxu0 0.0
    %84 = vmatpush1.msra.mxu0 0.0
    %85 = vmatprep.subr.mxu0 0.0
    %86 = vmatpush1.msra.mxu0 0.0
    %87 = vmatprep.subr.mxu0 0.0
    %88 = vmatpush1.msra.mxu0 0.0
    %89 = vmatprep.subr.mxu0 0.0
    %90 = vmatpush1.msra.mxu0 0.0
    %91 = vmatprep.subr.mxu0 0.0
    %92 = vmatpush1.msra.mxu0 0.0
    %93 = vmatprep.subr.mxu0 0.0
    %94 = vmatpush1.msra.mxu0 0.0
    %95 = vmatprep.subr.mxu0 0.0
    %96 = vmatpush1.msra.mxu0 0.0
    %97 = vmatprep.subr.mxu0 0.0
    %98 = vmatpush1.msra.mxu0 0.0
    %99 = vmatprep.subr.mxu0 0.0
    %100 = vmatpush1.msra.mxu0 0.0
    %101 = vmatprep.subr.mxu0 0.0
    %102 = vmatpush1.msra.mxu0 0.0
    %103 = vmatprep.subr.mxu0 0.0
    %104 = vmatpush1.msra.mxu0 0.0
    %105 = vmatprep.mubr.f32.mxu0 0.0
    %106 = vmatmul.mubr.f32.gmra.mrb[0].mxu0 %v36
    %v107 = vpop.f32.mrb[0].mxu0
    %v108 = vadd.f32 %v32, %v107
    %v109 = vpop.f32.mrb[0].mxu0
    %110 = vmatprep.mubr.f32.mxu0 0.0
    %111 = vmatmul.mubr.f32.gmra.mrb[0].mxu0 %v39
    %v112 = vpop.f32.mrb[0].mxu0
    %v113 = vadd.f32 %v32, %v112
    %v114 = vpop.f32.mrb[0].mxu0
    %115 = vdwg.mxu0
    %v116 = vmul.f32 %v108, %v108
    %v117 = vmul.f32 %v113, %v113
    %v118 = vmul.f32 %v116, %v108
    %v119 = vmul.f32 %v117, %v113
    %v120 = vmul.f32 %v118, 0.044715
    %v121 = vmul.f32 %v119, 0.044715
    %v122 = vadd.f32 %v108, %v120
    %v123 = vadd.f32 %v113, %v121
    %v124 = vmul.f32 %v122, 1.5957692
    %v125 = vmul.f32 %v123, 1.5957692
    %v126 = vsub.f32 0.0, %v124
    %v127 = vsub.f32 0.0, %v125
    %v128 = vmul.f32 %v126, 1.442695
    %v129 = vpow.pop %v128
    %v130 = vmul.f32 %v127, 1.442695
    %v131 = vpow.pop %v130
    %v132 = vadd.f32 %v129, 1.0
    %v133 = vadd.f32 %v131, 1.0
    %v134 = vrcp.pop %v132
    %v135 = vmul.f32 %v108, %v134
    %v136 = vrcp.pop %v133
    %v137 = vmul.f32 %v113, %v136
    %v138 = vld [vmem:[%s3] sm:$0xff]
    %v139 = vld [vmem:[%s3 + $0x8] sm:$0xff]
    %v140 = vld [vmem:[%s3 + $0x10] sm:$0xff]
    %v141 = vld [vmem:[%s3 + $0x18] sm:$0xff]
    %v142 = vld [vmem:[%s3 + $0x20] sm:$0xff]
    %v143 = vld [vmem:[%s3 + $0x28] sm:$0xff]
    %v144 = vld [vmem:[%s3 + $0x30] sm:$0xff]
    %v145 = vld [vmem:[%s3 + $0x38] sm:$0xff]
    %v146 = vld [vmem:[%s3 + $0x40] sm:$0xff]
    %v147 = vld [vmem:[%s3 + $0x48] sm:$0xff]
    %v148 = vld [vmem:[%s3 + $0x50] sm:$0xff]
    %v149 = vld [vmem:[%s3 + $0x58] sm:$0xff]
    %v150 = vld [vmem:[%s3 + $0x60] sm:$0xff]
    %v151 = vld [vmem:[%s3 + $0x68] sm:$0xff]
    %v152 = vld [vmem:[%s3 + $0x70] sm:$0xff]
    %v153 = vld [vmem:[%s3 + $0x78] sm:$0xff]
    %v154 = vld [vmem:[%s4] sm:$0x1]
    %v156 = vlaneseq
    %v157 = vshrl.u32 %v156, 7
    %v158 = vsub.s32 0, %v157
    %v159 = vrot.slane %v154, %v158
    %161 = vmatprep.subr.mxu0 0.0
    %162 = vmatpush1.msra.mxu0 %v138
    %163 = vmatprep.subr.mxu0 0.0
    %164 = vmatpush1.msra.mxu0 %v139
    %165 = vmatprep.subr.mxu0 0.0
    %166 = vmatpush1.msra.mxu0 %v140
    %167 = vmatprep.subr.mxu0 0.0
    %168 = vmatpush1.msra.mxu0 %v141
    %169 = vmatprep.subr.mxu0 0.0
    %170 = vmatpush1.msra.mxu0 %v142
    %171 = vmatprep.subr.mxu0 0.0
    %172 = vmatpush1.msra.mxu0 %v143
    %173 = vmatprep.subr.mxu0 0.0
    %174 = vmatpush1.msra.mxu0 %v144
    %175 = vmatprep.subr.mxu0 0.0
    %176 = vmatpush1.msra.mxu0 %v145
    %177 = vmatprep.subr.mxu0 0.0
    %178 = vmatpush1.msra.mxu0 %v146
    %179 = vmatprep.subr.mxu0 0.0
    %180 = vmatpush1.msra.mxu0 %v147
    %181 = vmatprep.subr.mxu0 0.0
    %182 = vmatpush1.msra.mxu0 %v148
    %183 = vmatprep.subr.mxu0 0.0
    %184 = vmatpush1.msra.mxu0 %v149
    %185 = vmatprep.subr.mxu0 0.0
    %186 = vmatpush1.msra.mxu0 %v150
    %187 = vmatprep.subr.mxu0 0.0
    %188 = vmatpush1.msra.mxu0 %v151
    %189 = vmatprep.subr.mxu0 0.0
    %190 = vmatpush1.msra.mxu0 %v152
    %191 = vmatprep.subr.mxu0 0.0
    %192 = vmatpush1.msra.mxu0 %v153
    %193 = vmatprep.subr.mxu0 0.0
    %194 = vmatpush1.msra.mxu0 0.0
    %195 = vmatprep.subr.mxu0 0.0
    %196 = vmatpush1.msra.mxu0 0.0
    %197 = vmatprep.subr.mxu0 0.0
    %198 = vmatpush1.msra.mxu0 0.0
    %199 = vmatprep.subr.mxu0 0.0
    %200 = vmatpush1.msra.mxu0 0.0
    %201 = vmatprep.subr.mxu0 0.0
    %202 = vmatpush1.msra.mxu0 0.0
    %203 = vmatprep.subr.mxu0 0.0
    %204 = vmatpush1.msra.mxu0 0.0
    %205 = vmatprep.subr.mxu0 0.0
    %206 = vmatpush1.msra.mxu0 0.0
    %207 = vmatprep.subr.mxu0 0.0
    %208 = vmatpush1.msra.mxu0 0.0
    %209 = vmatprep.subr.mxu0 0.0
    %210 = vmatpush1.msra.mxu0 0.0
    %211 = vmatprep.subr.mxu0 0.0
    %212 = vmatpush1.msra.mxu0 0.0
    %213 = vmatprep.subr.mxu0 0.0
    %214 = vmatpush1.msra.mxu0 0.0
    %215 = vmatprep.subr.mxu0 0.0
    %216 = vmatpush1.msra.mxu0 0.0
    %217 = vmatprep.subr.mxu0 0.0
    %218 = vmatpush1.msra.mxu0 0.0
    %219 = vmatprep.subr.mxu0 0.0
    %220 = vmatpush1.msra.mxu0 0.0
    %221 = vmatprep.subr.mxu0 0.0
    %222 = vmatpush1.msra.mxu0 0.0
    %223 = vmatprep.subr.mxu0 0.0
    %224 = vmatpush1.msra.mxu0 0.0
    %225 = vmatprep.mubr.f32.mxu0 0.0
    %226 = vmatmul.mubr.f32.gmra.mrb[0].mxu0 %v135
    %v227 = vpop.f32.mrb[0].mxu0
    %v228 = vadd.f32 %v159, %v227
    %v229 = vpop.f32.mrb[0].mxu0
    %230 = vmatprep.mubr.f32.mxu0 0.0
    %231 = vmatmul.mubr.f32.gmra.mrb[0].mxu0 %v137
    %v232 = vpop.f32.mrb[0].mxu0
    %v233 = vadd.f32 %v159, %v232
    %v234 = vpop.f32.mrb[0].mxu0
    %235 = vdwg.mxu0
    %236 = vst.msk [vmem:[#allocation2] sm:$0xff] %vm34, %v228
    %237 = vst.msk [vmem:[#allocation2 + $0x8] sm:$0xff] %vm34, %v233
    // Predicated region
    $region22: #{tpu_custom_call.1} parent=1 // pred_check
      _
    $region23: #{tpu_custom_call.1} parent=1 // pred_check_branch
      %239 = sbr.rel (0) target = $region25
    $region24: #{tpu_custom_call.1} parent=1 // pred_region
      %s241 = ssub.s32 256, 256
      %242 = vsyncadd [#allocation3], %s241
      %s243 = sshll.u32 [#allocation2], 4
      %s244 = int_to_ptr.vmem [resolvable:$true] %s243
      %249 = dma.vmem_to_hbm [thread:$0]  %s244, 256, %s5, [#allocation3], 128, 128, 8
    $region25: #{tpu_custom_call.1} parent=1 // pred_fallthru
      _
    // Predicated region
    $region26: #{tpu_custom_call.1} parent=1 // pred_check
      _
    $region27: #{tpu_custom_call.1} parent=1 // pred_check_branch
      %251 = sbr.rel (0) target = $region29
    $region28: #{tpu_custom_call.1} parent=1 // pred_region
      %252 = dma.done [#allocation3], 256
    $region29: #{tpu_custom_call.1} parent=1 // pred_fallthru
      _
    %253 = vsyncpa [#allocation3], 1

</llo_original>
